<compile_context>
chip_gen: v7x
topology: tpu7x:2x2x1
jax: 0.10.0
libtpu: 0.0.40
codegen_flags: <defaults>
</compile_context>

<pallas_src>
import jax
import jax.numpy as jnp
from jax.experimental import pallas as pl
from jax.experimental.pallas import tpu as pltpu

_LANES = 128


def _round_up(v, m):
    return ((v + m - 1) // m) * m


def _mse_alive2_kernel(x_ref, t_ref, alive_ref, pseudo_ref, out_ref, acc_ref):
    """One (block_rows, 128) tile: masked-sum/count accumulation on the VPU."""
    i = pl.program_id(1)

    @pl.when(i == 0)
    def _():
        acc_ref[...] = jnp.zeros_like(acc_ref)

    x = x_ref[...]          # (block_rows, 128) f32
    t = t_ref[...]          # (block_rows, 128) f32
    alive = alive_ref[...]  # (block_rows, 128) i32
    pseudo = pseudo_ref[...]

    valid_mask = (pseudo == 2) & ((x < t) | (alive == 0))
    pseudo_mask = pseudo == 1

    diff = x - t
    sq = diff * diff

    br = x.shape[0]

    def fold(v):
        # (block_rows, 128) -> (8, 128): sum the stacked vregs (VPU adds only,
        # no cross-lane XLU work; the regroup keeps every (8,128) tile intact).
        return jnp.sum(v.reshape(br // 8, 8, _LANES), axis=0)

    acc_ref[0, :, :] += fold(jnp.where(valid_mask, sq, 0.0))
    acc_ref[1, :, :] += fold(valid_mask.astype(jnp.float32))
    acc_ref[2, :, :] += fold(jnp.where(pseudo_mask, sq, 0.0))
    acc_ref[3, :, :] += fold(pseudo_mask.astype(jnp.float32))

    @pl.when(i == pl.num_programs(1) - 1)
    def _():
        out_ref[0] = acc_ref[...]


def mse_with_alive2_forward(inputs, target, target_label, alive, pseudo, bins,
                            weight=0.5, block_rows=512, num_splits=None):
    """Pallas implementation of MSE_with_alive2.forward.

    inputs: (N, 1) float   -> reshaped to (N,)
    target: (N,)   float
    target_label: (N, C)   (unused in forward, kept for signature parity)
    alive:  (N,)   int
    pseudo: (N,)   int      (values in {0, 1, 2})
    bins:   (C,)            (unused in forward)
    """
    del target_label, bins  # not used by MSE_with_alive2.forward

    n = inputs.shape[0]
    x = jnp.reshape(inputs, (n,)).astype(jnp.float32)
    t = jnp.asarray(target, jnp.float32)
    a = jnp.asarray(alive, jnp.int32)
    p = jnp.asarray(pseudo, jnp.int32)

    # ---- layout planning: (rows_pad, 128), rows_pad multiple of block_rows ----
    rows = -(-n // _LANES)                 # ceil(n / 128)
    rows8 = _round_up(max(rows, 1), 8)
    block_rows = _round_up(min(int(block_rows), rows8), 8)
    nblocks = -(-rows8 // block_rows)
    if num_splits is None:
        num_splits = 2 if nblocks >= 2 else 1   # 2-way split -> v7x dual TC
    nblocks = _round_up(nblocks, num_splits)
    steps_per_split = nblocks // num_splits
    rows_pad = nblocks * block_rows
    n_pad = rows_pad * _LANES
    pad = n_pad - n

    # Zero padding: pseudo == 0 on padded lanes => neither mask fires, so the
    # padded tail contributes nothing to any sum or count (no iota mask needed).
    if pad:
        x = jnp.pad(x, (0, pad))
        t = jnp.pad(t, (0, pad))
        a = jnp.pad(a, (0, pad))
        p = jnp.pad(p, (0, pad))
    x = x.reshape(rows_pad, _LANES)
    t = t.reshape(rows_pad, _LANES)
    a = a.reshape(rows_pad, _LANES)
    p = p.reshape(rows_pad, _LANES)

    def _in_map(steps):
        def idx(s, i):
            return (s * steps + i, 0)
        return idx

    in_spec = pl.BlockSpec((block_rows, _LANES), _in_map(steps_per_split))
    out_spec = pl.BlockSpec((1, 4, 8, _LANES), lambda s, i: (s, 0, 0, 0))

    partials = pl.pallas_call(
        _mse_alive2_kernel,
        out_shape=jax.ShapeDtypeStruct((num_splits, 4, 8, _LANES), jnp.float32),
        grid_spec=pltpu.PrefetchScalarGridSpec(
            num_scalar_prefetch=0,
            grid=(num_splits, steps_per_split),
            in_specs=[in_spec, in_spec, in_spec, in_spec],
            out_specs=out_spec,
            scratch_shapes=[pltpu.VMEM((4, 8, _LANES), jnp.float32)],
        ),
        compiler_params=pltpu.CompilerParams(
            dimension_semantics=("parallel", "arbitrary")),
    )(x, t, a, p)

    # Tiny epilogue: combine per-split (8,128) partials -> 4 scalars.
    totals = jnp.sum(partials, axis=(0, 2, 3))   # (4,)
    sum_valid, cnt_valid, sum_pseudo, cnt_pseudo = (
        totals[0], totals[1], totals[2], totals[3])

    # MSELoss mean over selected elements; 0.0 when the selection is empty
    # (matches the torch `if count != 0` branches).
    loss_true = jnp.where(cnt_valid > 0.0,
                          sum_valid / jnp.maximum(cnt_valid, 1.0), 0.0)
    loss_pseudo = jnp.where(cnt_pseudo > 0.0,
                            sum_pseudo / jnp.maximum(cnt_pseudo, 1.0), 0.0)
    return loss_true + jnp.float32(weight) * loss_pseudo


def _reference(inputs, target, alive, pseudo, weight=0.5):
    x = jnp.reshape(inputs, (inputs.shape[0],)).astype(jnp.float32)
    t = target.astype(jnp.float32)
    valid = (pseudo == 2) & ((x < t) | (alive == 0))
    pmask = pseudo == 1
    sq = (x - t) ** 2
    cv = jnp.sum(valid)
    cp = jnp.sum(pmask)
    lt = jnp.where(cv > 0, jnp.sum(jnp.where(valid, sq, 0.0)) / jnp.maximum(cv, 1), 0.0)
    lp = jnp.where(cp > 0, jnp.sum(jnp.where(pmask, sq, 0.0)) / jnp.maximum(cp, 1), 0.0)
    return lt + weight * lp


if __name__ == "__main__":
    key = jax.random.PRNGKey(0)
    k1, k2, k3, k4, k5, k6, k7, k8, k9 = jax.random.split(key, 9)

    # --- small case (seq=8 samples, 4 survival bins; label/bins unused in fwd) ---
    N, C = 8, 4
    inputs = jax.random.normal(k1, (N, 1), jnp.float32) * 100.0 + 300.0
    target = jax.random.uniform(k2, (N,), jnp.float32, 100.0, 600.0)
    target_label = jax.random.normal(k3, (N, C), jnp.float32)
    alive = jax.random.randint(k4, (N,), 0, 2).astype(jnp.int32)
    pseudo = jax.random.randint(k5, (N,), 0, 3).astype(jnp.int32)
    bins = jnp.arange(C, dtype=jnp.float32) * 150.0

    loss = mse_with_alive2_forward(inputs, target, target_label, alive, pseudo, bins)
    loss = jax.block_until_ready(loss)
    ref = _reference(inputs, target, alive, pseudo)
    assert jnp.allclose(loss, ref, rtol=1e-5, atol=1e-5), (loss, ref)

    # --- slightly larger case exercising padding, the row grid and the 2-way
    #     parallel split (block_rows forced small so the grid has >1 step) ---
    N2 = 3000
    inputs2 = jax.random.normal(k6, (N2, 1), jnp.float32) * 100.0 + 300.0
    target2 = jax.random.uniform(k7, (N2,), jnp.float32, 100.0, 600.0)
    alive2 = jax.random.randint(k8, (N2,), 0, 2).astype(jnp.int32)
    pseudo2 = jax.random.randint(k9, (N2,), 0, 3).astype(jnp.int32)
    target_label2 = jnp.zeros((N2, C), jnp.float32)

    loss2 = mse_with_alive2_forward(inputs2, target2, target_label2, alive2,
                                    pseudo2, bins, block_rows=8)
    loss2 = jax.block_until_ready(loss2)
    ref2 = _reference(inputs2, target2, alive2, pseudo2)
    assert jnp.allclose(loss2, ref2, rtol=1e-5, atol=1e-5), (loss2, ref2)

    print("KERNEL_OK")
</pallas_src>

<mosaic_0001>
module attributes {stable_mosaic.version = 11 : i64} {
  func.func @_mse_alive2_kernel(%arg0: i32, %arg1: i32, %arg2: memref<8x128xf32, #tpu.memory_space<vmem>>, %arg3: memref<8x128xf32, #tpu.memory_space<vmem>>, %arg4: memref<8x128xi32, #tpu.memory_space<vmem>>, %arg5: memref<8x128xi32, #tpu.memory_space<vmem>>, %arg6: memref<1x4x8x128xf32, #tpu.memory_space<vmem>>, %arg7: memref<4x8x128xf32, #tpu.memory_space<vmem>>) attributes {dimension_semantics = [#tpu.dimension_semantics<parallel>, #tpu.dimension_semantics<arbitrary>], iteration_bounds = array<i64: 1, 1>, scalar_prefetch = 0 : i64, scratch_operands = 1 : i64, tpu.core_type = #tpu.core_type<tc>, window_params = [{transform_indices = @transform_0, window_bounds = array<i64: 8, 128>}, {transform_indices = @transform_1, window_bounds = array<i64: 8, 128>}, {transform_indices = @transform_2, window_bounds = array<i64: 8, 128>}, {transform_indices = @transform_3, window_bounds = array<i64: 8, 128>}, {transform_indices = @transform_4, window_bounds = array<i64: 1, 4, 8, 128>}]} {
    %c0_i32 = arith.constant 0 : i32
    %0 = arith.cmpi eq, %arg1, %c0_i32 : i32
    %1 = arith.extui %0 : i1 to i32
    %c0_i32_0 = arith.constant 0 : i32
    %2 = arith.cmpi ne, %1, %c0_i32_0 : i32
    scf.if %2 {
      %cst_37 = arith.constant 0.000000e+00 : f32
      %61 = vector.broadcast %cst_37 : f32 to vector<4x8x128xf32>
      %c0_38 = arith.constant 0 : index
      %c0_39 = arith.constant 0 : index
      %c0_40 = arith.constant 0 : index
      %62 = vector.load %arg7[%c0_38, %c0_39, %c0_40] : memref<4x8x128xf32, #tpu.memory_space<vmem>>, vector<4x8x128xf32>
      tpu.vector_store %arg7[%c0_38, %c0_39, %c0_40], %61 {strides = array<i32>} : memref<4x8x128xf32, #tpu.memory_space<vmem>>, vector<4x8x128xf32>,
    } else {
    }
    %c0 = arith.constant 0 : index
    %c0_1 = arith.constant 0 : index
    %3 = vector.load %arg2[%c0, %c0_1] : memref<8x128xf32, #tpu.memory_space<vmem>>, vector<8x128xf32>
    %c0_2 = arith.constant 0 : index
    %c0_3 = arith.constant 0 : index
    %4 = vector.load %arg3[%c0_2, %c0_3] : memref<8x128xf32, #tpu.memory_space<vmem>>, vector<8x128xf32>
    %c0_4 = arith.constant 0 : index
    %c0_5 = arith.constant 0 : index
    %5 = vector.load %arg4[%c0_4, %c0_5] : memref<8x128xi32, #tpu.memory_space<vmem>>, vector<8x128xi32>
    %c0_6 = arith.constant 0 : index
    %c0_7 = arith.constant 0 : index
    %6 = vector.load %arg5[%c0_6, %c0_7] : memref<8x128xi32, #tpu.memory_space<vmem>>, vector<8x128xi32>
    %c2_i32 = arith.constant 2 : i32
    %7 = vector.broadcast %c2_i32 : i32 to vector<8x128xi32>
    %8 = arith.cmpi eq, %6, %7 : vector<8x128xi32>
    %9 = arith.cmpf olt, %3, %4 : vector<8x128xf32>
    %c0_i32_8 = arith.constant 0 : i32
    %10 = vector.broadcast %c0_i32_8 : i32 to vector<8x128xi32>
    %11 = arith.cmpi eq, %5, %10 : vector<8x128xi32>
    %12 = arith.ori %9, %11 : vector<8x128xi1>
    %13 = arith.andi %8, %12 : vector<8x128xi1>
    %c1_i32 = arith.constant 1 : i32
    %14 = vector.broadcast %c1_i32 : i32 to vector<8x128xi32>
    %15 = arith.cmpi eq, %6, %14 : vector<8x128xi32>
    %16 = arith.subf %3, %4 : vector<8x128xf32>
    %17 = arith.mulf %16, %16 : vector<8x128xf32>
    %c0_9 = arith.constant 0 : index
    %c0_10 = arith.constant 0 : index
    %c0_11 = arith.constant 0 : index
    %18 = vector.load %arg7[%c0_9, %c0_10, %c0_11] : memref<4x8x128xf32, #tpu.memory_space<vmem>>, vector<1x8x128xf32>
    %19 = vector.shape_cast %18 : vector<1x8x128xf32> to vector<8x128xf32>
    %cst = arith.constant 0.000000e+00 : f32
    %20 = vector.broadcast %cst : f32 to vector<8x128xf32>
    %21 = arith.select %13, %17, %20 : vector<8x128xi1>, vector<8x128xf32>
    %22 = vector.shape_cast %21 : vector<8x128xf32> to vector<1x8x128xf32>
    %cst_12 = arith.constant dense<0.000000e+00> : vector<8x128xf32>
    %23 = vector.multi_reduction <add>, %22, %cst_12 [0] : vector<1x8x128xf32> to vector<8x128xf32>
    %24 = arith.addf %19, %23 : vector<8x128xf32>
    %c0_13 = arith.constant 0 : index
    %c0_14 = arith.constant 0 : index
    %c0_15 = arith.constant 0 : index
    %25 = vector.load %arg7[%c0_13, %c0_14, %c0_15] : memref<4x8x128xf32, #tpu.memory_space<vmem>>, vector<1x8x128xf32>
    %26 = vector.shape_cast %25 : vector<1x8x128xf32> to vector<8x128xf32>
    %27 = vector.shape_cast %24 : vector<8x128xf32> to vector<1x8x128xf32>
    tpu.vector_store %arg7[%c0_13, %c0_14, %c0_15], %27 {strides = array<i32>} : memref<4x8x128xf32, #tpu.memory_space<vmem>>, vector<1x8x128xf32>,
    %c1 = arith.constant 1 : index
    %c0_16 = arith.constant 0 : index
    %c0_17 = arith.constant 0 : index
    %28 = vector.load %arg7[%c1, %c0_16, %c0_17] : memref<4x8x128xf32, #tpu.memory_space<vmem>>, vector<1x8x128xf32>
    %29 = vector.shape_cast %28 : vector<1x8x128xf32> to vector<8x128xf32>
    %30 = arith.extui %13 : vector<8x128xi1> to vector<8x128xi32>
    %31 = arith.sitofp %30 : vector<8x128xi32> to vector<8x128xf32>
    %32 = vector.shape_cast %31 : vector<8x128xf32> to vector<1x8x128xf32>
    %cst_18 = arith.constant dense<0.000000e+00> : vector<8x128xf32>
    %33 = vector.multi_reduction <add>, %32, %cst_18 [0] : vector<1x8x128xf32> to vector<8x128xf32>
    %34 = arith.addf %29, %33 : vector<8x128xf32>
    %c1_19 = arith.constant 1 : index
    %c0_20 = arith.constant 0 : index
    %c0_21 = arith.constant 0 : index
    %35 = vector.load %arg7[%c1_19, %c0_20, %c0_21] : memref<4x8x128xf32, #tpu.memory_space<vmem>>, vector<1x8x128xf32>
    %36 = vector.shape_cast %35 : vector<1x8x128xf32> to vector<8x128xf32>
    %37 = vector.shape_cast %34 : vector<8x128xf32> to vector<1x8x128xf32>
    tpu.vector_store %arg7[%c1_19, %c0_20, %c0_21], %37 {strides = array<i32>} : memref<4x8x128xf32, #tpu.memory_space<vmem>>, vector<1x8x128xf32>,
    %c2 = arith.constant 2 : index
    %c0_22 = arith.constant 0 : index
    %c0_23 = arith.constant 0 : index
    %38 = vector.load %arg7[%c2, %c0_22, %c0_23] : memref<4x8x128xf32, #tpu.memory_space<vmem>>, vector<1x8x128xf32>
    %39 = vector.shape_cast %38 : vector<1x8x128xf32> to vector<8x128xf32>
    %cst_24 = arith.constant 0.000000e+00 : f32
    %40 = vector.broadcast %cst_24 : f32 to vector<8x128xf32>
    %41 = arith.select %15, %17, %40 : vector<8x128xi1>, vector<8x128xf32>
    %42 = vector.shape_cast %41 : vector<8x128xf32> to vector<1x8x128xf32>
    %cst_25 = arith.constant dense<0.000000e+00> : vector<8x128xf32>
    %43 = vector.multi_reduction <add>, %42, %cst_25 [0] : vector<1x8x128xf32> to vector<8x128xf32>
    %44 = arith.addf %39, %43 : vector<8x128xf32>
    %c2_26 = arith.constant 2 : index
    %c0_27 = arith.constant 0 : index
    %c0_28 = arith.constant 0 : index
    %45 = vector.load %arg7[%c2_26, %c0_27, %c0_28] : memref<4x8x128xf32, #tpu.memory_space<vmem>>, vector<1x8x128xf32>
    %46 = vector.shape_cast %45 : vector<1x8x128xf32> to vector<8x128xf32>
    %47 = vector.shape_cast %44 : vector<8x128xf32> to vector<1x8x128xf32>
    tpu.vector_store %arg7[%c2_26, %c0_27, %c0_28], %47 {strides = array<i32>} : memref<4x8x128xf32, #tpu.memory_space<vmem>>, vector<1x8x128xf32>,
    %c3 = arith.constant 3 : index
    %c0_29 = arith.constant 0 : index
    %c0_30 = arith.constant 0 : index
    %48 = vector.load %arg7[%c3, %c0_29, %c0_30] : memref<4x8x128xf32, #tpu.memory_space<vmem>>, vector<1x8x128xf32>
    %49 = vector.shape_cast %48 : vector<1x8x128xf32> to vector<8x128xf32>
    %50 = arith.extui %15 : vector<8x128xi1> to vector<8x128xi32>
    %51 = arith.sitofp %50 : vector<8x128xi32> to vector<8x128xf32>
    %52 = vector.shape_cast %51 : vector<8x128xf32> to vector<1x8x128xf32>
    %cst_31 = arith.constant dense<0.000000e+00> : vector<8x128xf32>
    %53 = vector.multi_reduction <add>, %52, %cst_31 [0] : vector<1x8x128xf32> to vector<8x128xf32>
    %54 = arith.addf %49, %53 : vector<8x128xf32>
    %c3_32 = arith.constant 3 : index
    %c0_33 = arith.constant 0 : index
    %c0_34 = arith.constant 0 : index
    %55 = vector.load %arg7[%c3_32, %c0_33, %c0_34] : memref<4x8x128xf32, #tpu.memory_space<vmem>>, vector<1x8x128xf32>
    %56 = vector.shape_cast %55 : vector<1x8x128xf32> to vector<8x128xf32>
    %57 = vector.shape_cast %54 : vector<8x128xf32> to vector<1x8x128xf32>
    tpu.vector_store %arg7[%c3_32, %c0_33, %c0_34], %57 {strides = array<i32>} : memref<4x8x128xf32, #tpu.memory_space<vmem>>, vector<1x8x128xf32>,
    %c0_i32_35 = arith.constant 0 : i32
    %58 = arith.cmpi eq, %arg1, %c0_i32_35 : i32
    %59 = arith.extui %58 : i1 to i32
    %c0_i32_36 = arith.constant 0 : i32
    %60 = arith.cmpi ne, %59, %c0_i32_36 : i32
    scf.if %60 {
      %c0_37 = arith.constant 0 : index
      %c0_38 = arith.constant 0 : index
      %c0_39 = arith.constant 0 : index
      %61 = vector.load %arg7[%c0_37, %c0_38, %c0_39] : memref<4x8x128xf32, #tpu.memory_space<vmem>>, vector<4x8x128xf32>
      %c0_40 = arith.constant 0 : index
      %c0_41 = arith.constant 0 : index
      %c0_42 = arith.constant 0 : index
      %c0_43 = arith.constant 0 : index
      %62 = vector.load %arg6[%c0_40, %c0_41, %c0_42, %c0_43] : memref<1x4x8x128xf32, #tpu.memory_space<vmem>>, vector<1x4x8x128xf32>
      %63 = vector.shape_cast %62 : vector<1x4x8x128xf32> to vector<4x8x128xf32>
      %64 = vector.shape_cast %61 : vector<4x8x128xf32> to vector<1x4x8x128xf32>
      tpu.vector_store %arg6[%c0_40, %c0_41, %c0_42, %c0_43], %64 {strides = array<i32>} : memref<1x4x8x128xf32, #tpu.memory_space<vmem>>, vector<1x4x8x128xf32>,
    } else {
    }
    return
  }
  func.func @transform_0(%arg0: i32, %arg1: i32) -> (i32, i32) {
    %c1_i32 = arith.constant 1 : i32
    %0 = arith.muli %arg0, %c1_i32 : i32
    %1 = arith.addi %0, %arg1 : i32
    %c0_i32 = arith.constant 0 : i32
    %c0_i32_0 = arith.constant 0 : i32
    return %1, %c0_i32 : i32, i32
  }
  func.func @transform_1(%arg0: i32, %arg1: i32) -> (i32, i32) {
    %c1_i32 = arith.constant 1 : i32
    %0 = arith.muli %arg0, %c1_i32 : i32
    %1 = arith.addi %0, %arg1 : i32
    %c0_i32 = arith.constant 0 : i32
    %c0_i32_0 = arith.constant 0 : i32
    return %1, %c0_i32 : i32, i32
  }
  func.func @transform_2(%arg0: i32, %arg1: i32) -> (i32, i32) {
    %c1_i32 = arith.constant 1 : i32
    %0 = arith.muli %arg0, %c1_i32 : i32
    %1 = arith.addi %0, %arg1 : i32
    %c0_i32 = arith.constant 0 : i32
    %c0_i32_0 = arith.constant 0 : i32
    return %1, %c0_i32 : i32, i32
  }
  func.func @transform_3(%arg0: i32, %arg1: i32) -> (i32, i32) {
    %c1_i32 = arith.constant 1 : i32
    %0 = arith.muli %arg0, %c1_i32 : i32
    %1 = arith.addi %0, %arg1 : i32
    %c0_i32 = arith.constant 0 : i32
    %c0_i32_0 = arith.constant 0 : i32
    return %1, %c0_i32 : i32, i32
  }
  func.func @transform_4(%arg0: i32, %arg1: i32) -> (i32, i32, i32, i32) {
    %c0_i32 = arith.constant 0 : i32
    %c0_i32_0 = arith.constant 0 : i32
    %c0_i32_1 = arith.constant 0 : i32
    %c0_i32_2 = arith.constant 0 : i32
    return %arg0, %c0_i32, %c0_i32_0, %c0_i32_1 : i32, i32, i32, i32
  }
}

</mosaic_0001>

<llo_original>
// kernel: tpu_custom_call.1
$region0: #{tpu_custom_call.1}
  #allocation0 [shape = 'u32[]', space=smem, size = 0x4, offset = 0x4, fixed_abs, tag = 'smem constant byte address 0x4 - core index']
  #allocation1 [shape = 'u32[144,128]{1,0:T(1,128)}', space=vmem, size = 0x12000, scoped, tag = 'internal scratch']
  #allocation2 [shape = 'f32[4,8,128]{2,1,0:T(8,128)}', space=vmem, size = 0x4000, scoped, tag = 'scratch operand']
  %s0 = inlined_call_operand.hbm [shape: f32[8,128], index: 0, kind: input, shape index: {}]
  %s1 = inlined_call_operand.hbm [shape: f32[8,128], index: 1, kind: input, shape index: {}]
  %s2 = inlined_call_operand.hbm [shape: s32[8,128], index: 2, kind: input, shape index: {}]
  %s3 = inlined_call_operand.vmem [shape: s32[8,128], index: 3, kind: input, shape index: {}]
  %s4 = inlined_call_operand.hbm [shape: f32[1,4,8,128], index: 4, kind: output, shape index: {}]
  %s5 = sld [smem:[#allocation0]]
  $region46: #{tpu_custom_call.1} parent=0
    _
  %s7 = ssub.s32 1, %s5
  %s8 = scalar_select 0, %s7, %s5
  $region1: #{tpu_custom_call.1} parent=0
    #allocation3 [shape = 'u8[4096]{0}', space=vmem, size = 0x1000, scoped, tag = 'input window, operand 0, single buffered']
    #allocation4 [shape = 's32[1]{0}', space=sflag, size = 0x4, scoped, tag = 'scoped memory for tpu_custom_call.1']
    #allocation5 [shape = 's32[1]{0}', space=sflag, size = 0x4, scoped, tag = 'scoped memory for tpu_custom_call.1']
    #allocation6 [shape = 'u8[4096]{0}', space=vmem, size = 0x1000, scoped, tag = 'input window, operand 1, single buffered']
    #allocation7 [shape = 's32[1]{0}', space=sflag, size = 0x4, scoped, tag = 'scoped memory for tpu_custom_call.1']
    #allocation8 [shape = 'u8[4096]{0}', space=vmem, size = 0x1000, scoped, tag = 'input window, operand 2, single buffered']
    #allocation9 [shape = 'u8[16384]{0}', space=vmem, size = 0x4000, scoped, tag = 'output window, operand 0, single buffered']
    %9 = vsyncpa [#allocation4], 0
    %10 = vsyncpa [#allocation7], 0
    %11 = vsyncpa [#allocation5], 0
    // Predicated region
    $region2: #{tpu_custom_call.1} parent=1 // pred_check
      _
    $region3: #{tpu_custom_call.1} parent=1 // pred_check_branch
      %13 = sbr.rel (0) target = $region5
    $region4: #{tpu_custom_call.1} parent=1 // pred_region
      %s14 = sadd.s32 0, 0
      %s16 = ssub.s32 128, 128
      %17 = vsyncadd [#allocation4], %s16
      %s18 = smul.addr %s14, 128
      %s19 = scalar_lea.hbm %s0, %s18
      %s21 = sshll.u32 [#allocation3], 4
      %s22 = int_to_ptr.vmem [resolvable:$true] %s21
      %24 = dma.hbm_to_vmem [thread:$0]  %s19, 128, %s22, [#allocation4]
    $region5: #{tpu_custom_call.1} parent=1 // pred_fallthru
      _
    // Predicated region
    $region6: #{tpu_custom_call.1} parent=1 // pred_check
      _
    $region7: #{tpu_custom_call.1} parent=1 // pred_check_branch
      %26 = sbr.rel (0) target = $region9
    $region8: #{tpu_custom_call.1} parent=1 // pred_region
      %s27 = sadd.s32 0, 0
      %s29 = ssub.s32 128, 128
      %30 = vsyncadd [#allocation7], %s29
      %s31 = smul.addr %s27, 128
      %s32 = scalar_lea.hbm %s1, %s31
      %s34 = sshll.u32 [#allocation6], 4
      %s35 = int_to_ptr.vmem [resolvable:$true] %s34
      %37 = dma.hbm_to_vmem [thread:$0]  %s32, 128, %s35, [#allocation7]
    $region9: #{tpu_custom_call.1} parent=1 // pred_fallthru
      _
    // Predicated region
    $region10: #{tpu_custom_call.1} parent=1 // pred_check
      _
    $region11: #{tpu_custom_call.1} parent=1 // pred_check_branch
      %39 = sbr.rel (0) target = $region13
    $region12: #{tpu_custom_call.1} parent=1 // pred_region
      %s40 = sadd.s32 0, 0
      %s42 = ssub.s32 128, 128
      %43 = vsyncadd [#allocation7], %s42
      %s44 = smul.addr %s40, 128
      %s45 = scalar_lea.hbm %s2, %s44
      %s47 = sshll.u32 [#allocation8], 4
      %s48 = int_to_ptr.vmem [resolvable:$true] %s47
      %50 = dma.hbm_to_vmem [thread:$0]  %s45, 128, %s48, [#allocation7]
    $region13: #{tpu_custom_call.1} parent=1 // pred_fallthru
      _
    // Predicated region
    $region14: #{tpu_custom_call.1} parent=1 // pred_check
      _
    $region15: #{tpu_custom_call.1} parent=1 // pred_check_branch
      %52 = sbr.rel (0) target = $region17
    $region16: #{tpu_custom_call.1} parent=1 // pred_region
      %s53 = sadd.s32 0, 0
      %p54 = scmp.lt.s32.totalorder %s53, 0
      %s55 = scalar_select %p54, %s53, 0
      %s56 = smul.addr %s55, 8
      %s57 = scalar_lea.vmem %s3, %s56
      %s58 = sadd.s32 0, 0
    $region17: #{tpu_custom_call.1} parent=1 // pred_fallthru
      _
    // Predicated region
    $region18: #{tpu_custom_call.1} parent=1 // pred_check
      _
    $region19: #{tpu_custom_call.1} parent=1 // pred_check_branch
      %60 = sbr.rel (0) target = $region21
    $region20: #{tpu_custom_call.1} parent=1 // pred_region
      %61 = dma.done [#allocation4], 128
    $region21: #{tpu_custom_call.1} parent=1 // pred_fallthru
      _
    // Predicated region
    $region22: #{tpu_custom_call.1} parent=1 // pred_check
      _
    $region23: #{tpu_custom_call.1} parent=1 // pred_check_branch
      %63 = sbr.rel (0) target = $region25
    $region24: #{tpu_custom_call.1} parent=1 // pred_region
      %64 = dma.done [#allocation7], 128
    $region25: #{tpu_custom_call.1} parent=1 // pred_fallthru
      _
    // Predicated region
    $region26: #{tpu_custom_call.1} parent=1 // pred_check
      _
    $region27: #{tpu_custom_call.1} parent=1 // pred_check_branch
      %66 = sbr.rel (0) target = $region29
    $region28: #{tpu_custom_call.1} parent=1 // pred_region
      %67 = dma.done [#allocation7], 128
    $region29: #{tpu_custom_call.1} parent=1 // pred_fallthru
      _
    %s68 = sadd.s32 0, 0
    %p69 = scmp.lt.s32.totalorder %s68, 0
    %s70 = scalar_select %p69, %s68, 0
    %s71 = smul.addr %s70, 8
    %s72 = scalar_lea.vmem %s3, %s71
    %s73 = sadd.s32 0, 0
    %s74 = sadd.s32 0, 0
    %s75 = sadd.s32 0, 0
    %s76 = sadd.s32 0, 0
    %p77 = scmp.lt.s32.totalorder %s76, 0
    %s78 = scalar_select %p77, %s76, 0
    %s79 = smul.addr %s78, 8
    %s80 = scalar_lea.vmem %s3, %s79
    %s81 = sadd.s32 0, 0
    %p82 = scmp.eq.s32.totalorder 0, 0
    // Predicated region
    $region30: #{tpu_custom_call.1} parent=1 // pred_check
      %p83 = pneg %p82
    $region31: #{tpu_custom_call.1} parent=1 // pred_check_branch
      %85 = sbr.rel (%p83) target = $region33
    $region32: #{tpu_custom_call.1} parent=1 // pred_region
      %86 = vst [vmem:[#allocation2] sm:$0xff] 0.0
      %87 = vst [vmem:[#allocation2 + $0x8] sm:$0xff] 0.0
      %88 = vst [vmem:[#allocation2 + $0x10] sm:$0xff] 0.0
      %89 = vst [vmem:[#allocation2 + $0x18] sm:$0xff] 0.0
    $region33: #{tpu_custom_call.1} parent=1 // pred_fallthru
      _
    %v90 = vld [vmem:[#allocation3] sm:$0xff]
    %v91 = vld [vmem:[#allocation6] sm:$0xff]
    %v92 = vld [vmem:[#allocation8] sm:$0xff]
    %v93 = vld [vmem:[%s80] sm:$0xff]
    %vm94 = vcmp.eq.s32.totalorder %v93, 2
    %vm95 = vcmp.lt.f32.partialorder %v90, %v91
    %vm96 = vcmp.eq.s32.totalorder %v92, 0
    %vm97 = vmor %vm95, %vm96
    %vm98 = vmand %vm94, %vm97
    %vm99 = vcmp.eq.s32.totalorder %v93, 1
    %v100 = vsub.f32 %v90, %v91
    %v101 = vmul.f32 %v100, %v100
    %v102 = vld [vmem:[#allocation2] sm:$0xff]
    %v103 = vsel %vm98, %v101, 0.0
    %v104 = vadd.f32 %v103, 0.0
    %v105 = vadd.f32 %v102, %v104
    %106 = vst [vmem:[#allocation2] sm:$0xff] %v105
    %s107 = scalar_lea.vmem [#allocation2], 8
    %v108 = vld [vmem:[%s107] sm:$0xff]
    %v109 = vsel %vm98, 1, 0
    %v110 = vcvt.s32.f32 %v109
    %v111 = vadd.f32 %v110, 0.0
    %v112 = vadd.f32 %v108, %v111
    %113 = vst [vmem:[%s107] sm:$0xff] %v112
    %s114 = scalar_lea.vmem [#allocation2], 16
    %v115 = vld [vmem:[%s114] sm:$0xff]
    %v116 = vsel %vm99, %v101, 0.0
    %v117 = vadd.f32 %v116, 0.0
    %v118 = vadd.f32 %v115, %v117
    %119 = vst [vmem:[%s114] sm:$0xff] %v118
    %s120 = scalar_lea.vmem [#allocation2], 24
    %v121 = vld [vmem:[%s120] sm:$0xff]
    %v122 = vsel %vm99, 1, 0
    %v123 = vcvt.s32.f32 %v122
    %v124 = vadd.f32 %v123, 0.0
    %v125 = vadd.f32 %v121, %v124
    %126 = vst [vmem:[%s120] sm:$0xff] %v125
    // Predicated region
    $region34: #{tpu_custom_call.1} parent=1 // pred_check
      %p127 = pneg %p82
    $region35: #{tpu_custom_call.1} parent=1 // pred_check_branch
      %129 = sbr.rel (%p127) target = $region37
    $region36: #{tpu_custom_call.1} parent=1 // pred_region
      %v130 = vld [vmem:[#allocation2] sm:$0xff]
      %v131 = vld [vmem:[#allocation2 + $0x8] sm:$0xff]
      %v132 = vld [vmem:[#allocation2 + $0x10] sm:$0xff]
      %v133 = vld [vmem:[#allocation2 + $0x18] sm:$0xff]
      %134 = vst [vmem:[#allocation9] sm:$0xff] %v130
      %135 = vst [vmem:[#allocation9 + $0x8] sm:$0xff] %v131
      %136 = vst [vmem:[#allocation9 + $0x10] sm:$0xff] %v132
      %137 = vst [vmem:[#allocation9 + $0x18] sm:$0xff] %v133
    $region37: #{tpu_custom_call.1} parent=1 // pred_fallthru
      _
    // Predicated region
    $region38: #{tpu_custom_call.1} parent=1 // pred_check
      _
    $region39: #{tpu_custom_call.1} parent=1 // pred_check_branch
      %139 = sbr.rel (0) target = $region41
    $region40: #{tpu_custom_call.1} parent=1 // pred_region
      %s141 = ssub.s32 512, 512
      %142 = vsyncadd [#allocation5], %s141
      %s143 = sshll.u32 [#allocation9], 4
      %s144 = int_to_ptr.vmem [resolvable:$true] %s143
      %149 = dma.vmem_to_hbm [thread:$0]  %s144, 512, %s4, [#allocation5], 128, 128, 8
    $region41: #{tpu_custom_call.1} parent=1 // pred_fallthru
      _
    // Predicated region
    $region42: #{tpu_custom_call.1} parent=1 // pred_check
      _
    $region43: #{tpu_custom_call.1} parent=1 // pred_check_branch
      %151 = sbr.rel (0) target = $region45
    $region44: #{tpu_custom_call.1} parent=1 // pred_region
      %152 = dma.done [#allocation5], 512
    $region45: #{tpu_custom_call.1} parent=1 // pred_fallthru
      _
    %153 = vsyncpa [#allocation4], 1
    %154 = vsyncpa [#allocation7], 1
    %155 = vsyncpa [#allocation5], 1

</llo_original>
